<compile_context>
chip_gen: v7x
topology: tpu7x:2x2x1
jax: 0.10.0
libtpu: 0.0.40
codegen_flags: <defaults>
</compile_context>

<pallas_src>
import jax
import jax.numpy as jnp
from jax.experimental import pallas as pl
from jax.experimental.pallas import tpu as pltpu


# Below this many elements a fused XLA select beats a pallas_call launch.
_SMALL_INPUT_ELEMS = 256 * 1024          # ~1 MiB of f32
_LANE_WIDTHS = (1024, 512, 256, 128)     # lane-dense last-dim candidates
_MAX_BLOCK_ROWS = 1024                   # 1024 x 1024 f32 = 4 MiB per tile


def _prelu_kernel(alpha_ref, x_ref, o_ref):
    # alpha_ref: SMEM (1,) float32 scalar; x_ref / o_ref: VMEM (block_rows, lane_w).
    x = x_ref[...]
    a = alpha_ref[0].astype(x.dtype)     # native-dtype negative branch
    o_ref[...] = jnp.where(x >= 0, x, a * x)


def _prelu_reference(x, alpha):
    a = jnp.asarray(alpha, dtype=jnp.float32).reshape(()).astype(x.dtype)
    return jnp.where(x >= 0, x, a * x)


def _pick_lane_width(total):
    for w in _LANE_WIDTHS:
        if total % w == 0:
            return w
    return None


def _wants_core_parallel():
    # Only v7x has 2 TensorCores per chip; splitting the row grid across both
    # lets each TC stream half the HBM traffic for this bandwidth-bound op.
    try:
        kind = jax.devices()[0].device_kind.lower()
    except Exception:
        return False
    return "v7" in kind


def _launch(x2, alpha_s, block_rows, lane_w, semantics):
    rows = x2.shape[0]
    grid = (pl.cdiv(rows, block_rows),)
    nbytes = x2.size * x2.dtype.itemsize
    return pl.pallas_call(
        _prelu_kernel,
        out_shape=jax.ShapeDtypeStruct((rows, lane_w), x2.dtype),
        grid=grid,
        in_specs=[
            pl.BlockSpec(memory_space=pltpu.MemorySpace.SMEM),      # alpha (untiled)
            pl.BlockSpec((block_rows, lane_w), lambda i: (i, 0)),   # x tile
        ],
        out_specs=pl.BlockSpec((block_rows, lane_w), lambda i: (i, 0)),
        compiler_params=pltpu.CompilerParams(
            dimension_semantics=semantics,
            # double-buffered 4 MiB in + out tiles = 16 MiB; raise above v5e's
            # 16 MiB scoped-VMEM default with headroom (well under physical
            # VMEM on all generations incl. v7x's 64 MiB).
            vmem_limit_bytes=32 * 1024 * 1024,
        ),
        cost_estimate=pl.CostEstimate(
            flops=2 * x2.size, transcendentals=0, bytes_accessed=2 * nbytes),
    )(alpha_s, x2)


def prelu_pallas(x, alpha, *, min_pallas_elems=_SMALL_INPUT_ELEMS):
    """PReLU with a single shared weight `alpha`, matching torch.nn.PReLU()."""
    orig_shape = x.shape
    total = x.size

    # Tiny tensors: custom-call launch + DMA setup dominate; let XLA fuse it.
    if total < min_pallas_elems:
        return _prelu_reference(x, alpha)

    lane_w = _pick_lane_width(total)
    if lane_w is None:
        # Ragged element count (not a multiple of 128): padding + slicing would
        # add a full extra HBM pass to a purely bandwidth-bound op, so fall
        # back to the fused XLA select instead.
        return _prelu_reference(x, alpha)

    alpha_s = jnp.reshape(alpha, (1,)).astype(jnp.float32)
    rows = total // lane_w
    x2 = jnp.reshape(x, (rows, lane_w))      # row-major reshape: metadata only
    block_rows = min(rows, _MAX_BLOCK_ROWS)  # full-dim block if slab is small

    semantics_to_try = []
    if _wants_core_parallel():
        semantics_to_try.append((pltpu.CORE_PARALLEL,))
    semantics_to_try.append(("parallel",))

    last_err = None
    for sem in semantics_to_try:
        try:
            out2 = _launch(x2, alpha_s, block_rows, lane_w, sem)
            return jnp.reshape(out2, orig_shape)
        except Exception as e:  # core-parallel rejected -> retry with "parallel"
            last_err = e
    raise last_err


if __name__ == "__main__":
    key = jax.random.PRNGKey(0)
    k1, k2 = jax.random.split(key)

    # torch.nn.PReLU() default: one shared parameter initialized to 0.25
    alpha = jnp.array(0.25, dtype=jnp.float32)

    # Rank-4 NCHW input at the spec shape (PReLU_F32_R4). Forced through the
    # Pallas path so the kernel itself is exercised, plus the default wrapper
    # (which takes the small-input fast path for this size).
    x_small = jax.random.normal(k1, (2, 4, 16, 16), dtype=jnp.float32)
    ref_small = _prelu_reference(x_small, alpha)

    out_small = jax.block_until_ready(prelu_pallas(x_small, alpha, min_pallas_elems=0))
    out_small_default = jax.block_until_ready(prelu_pallas(x_small, alpha))
    assert out_small.shape == x_small.shape and out_small.dtype == x_small.dtype
    assert jnp.allclose(out_small, ref_small, atol=1e-6, rtol=1e-6)
    assert jnp.allclose(out_small_default, ref_small, atol=1e-6, rtol=1e-6)

    # Larger input exercises the multi-step (2-block) double-buffered grid.
    x_big = jax.random.normal(k2, (4, 4, 256, 512), dtype=jnp.float32)
    ref_big = _prelu_reference(x_big, alpha)
    out_big = jax.block_until_ready(prelu_pallas(x_big, alpha))
    assert out_big.shape == x_big.shape and out_big.dtype == x_big.dtype
    assert jnp.allclose(out_big, ref_big, atol=1e-6, rtol=1e-6)

    print("KERNEL_OK")
</pallas_src>

<mosaic_0001>
module attributes {stable_mosaic.version = 11 : i64} {
  func.func @_prelu_kernel(%arg0: i32, %arg1: memref<1xf32, #tpu.memory_space<smem>>, %arg2: memref<2x1024xf32, #tpu.memory_space<vmem>>, %arg3: memref<2x1024xf32, #tpu.memory_space<vmem>>) attributes {dimension_semantics = [#tpu.dimension_semantics<parallel>], iteration_bounds = array<i64: 1>, scalar_prefetch = 0 : i64, scratch_operands = 0 : i64, tpu.core_type = #tpu.core_type<tc>, window_params = [{transform_indices = @transform_0, window_bounds = array<i64: 1>}, {transform_indices = @transform_1, window_bounds = array<i64: 2, 1024>}, {transform_indices = @transform_2, window_bounds = array<i64: 2, 1024>}]} {
    %c0 = arith.constant 0 : index
    %c0_0 = arith.constant 0 : index
    %0 = vector.load %arg2[%c0, %c0_0] : memref<2x1024xf32, #tpu.memory_space<vmem>>, vector<2x1024xf32>
    %c0_1 = arith.constant 0 : index
    %1 = memref.load %arg1[%c0_1] : memref<1xf32, #tpu.memory_space<smem>>
    %cst = arith.constant 0.000000e+00 : f32
    %2 = vector.broadcast %cst : f32 to vector<2x1024xf32>
    %3 = arith.cmpf oge, %0, %2 : vector<2x1024xf32>
    %4 = vector.broadcast %1 : f32 to vector<2x1024xf32>
    %5 = arith.mulf %4, %0 : vector<2x1024xf32>
    %6 = arith.select %3, %0, %5 : vector<2x1024xi1>, vector<2x1024xf32>
    %c0_2 = arith.constant 0 : index
    %c0_3 = arith.constant 0 : index
    %7 = vector.load %arg3[%c0_2, %c0_3] : memref<2x1024xf32, #tpu.memory_space<vmem>>, vector<2x1024xf32>
    tpu.vector_store %arg3[%c0_2, %c0_3], %6 {strides = array<i32>} : memref<2x1024xf32, #tpu.memory_space<vmem>>, vector<2x1024xf32>,
    return
  }
  func.func @transform_0(%arg0: i32) -> i32 {
    %c0_i32 = arith.constant 0 : i32
    %c0_i32_0 = arith.constant 0 : i32
    return %c0_i32 : i32
  }
  func.func @transform_1(%arg0: i32) -> (i32, i32) {
    %c0_i32 = arith.constant 0 : i32
    %c0_i32_0 = arith.constant 0 : i32
    return %arg0, %c0_i32 : i32, i32
  }
  func.func @transform_2(%arg0: i32) -> (i32, i32) {
    %c0_i32 = arith.constant 0 : i32
    %c0_i32_0 = arith.constant 0 : i32
    return %arg0, %c0_i32 : i32, i32
  }
}

</mosaic_0001>

<llo_original>
// kernel: tpu_custom_call.1
$region0: #{tpu_custom_call.1}
  #allocation0 [shape = 'u32[]', space=smem, size = 0x4, offset = 0x4, fixed_abs, tag = 'smem constant byte address 0x4 - core index']
  #allocation1 [shape = 'u32[144,128]{1,0:T(1,128)}', space=vmem, size = 0x12000, scoped, tag = 'internal scratch']
  #allocation2 [shape = 'f32[1]{0:T(128)S(6)}', space=smem, size = 0x200, scoped, tag = 'scoped memory for tpu_custom_call.1']
  %s0 = inlined_call_operand.<no memory space> [shape: f32[1], index: 0, kind: input, shape index: {}]
  %s1 = inlined_call_operand.hbm [shape: f32[2,1024], index: 1, kind: input, shape index: {}]
  %s2 = inlined_call_operand.hbm [shape: f32[2,1024], index: 2, kind: output, shape index: {}]
  %s3 = sld [smem:[#allocation0]]
  $region22: #{tpu_custom_call.1} parent=0
    _
  %s5 = ssub.s32 1, %s3
  %s6 = scalar_select 0, %s5, %s3
  %7 = sst [smem:[#allocation2]] %s0
  $region1: #{tpu_custom_call.1} parent=0
    #allocation3 [shape = 'u8[8192]{0}', space=vmem, size = 0x2000, scoped, tag = 'input window, operand 1, single buffered']
    #allocation4 [shape = 's32[1]{0}', space=sflag, size = 0x4, scoped, tag = 'scoped memory for tpu_custom_call.1']
    #allocation5 [shape = 's32[1]{0}', space=sflag, size = 0x4, scoped, tag = 'scoped memory for tpu_custom_call.1']
    #allocation6 [shape = 'u8[8192]{0}', space=vmem, size = 0x2000, scoped, tag = 'output window, operand 0, single buffered']
    %8 = vsyncpa [#allocation4], 0
    %9 = vsyncpa [#allocation5], 0
    // Predicated region
    $region2: #{tpu_custom_call.1} parent=1 // pred_check
      _
    $region3: #{tpu_custom_call.1} parent=1 // pred_check_branch
      %11 = sbr.rel (0) target = $region5
    $region4: #{tpu_custom_call.1} parent=1 // pred_region
      _
    $region5: #{tpu_custom_call.1} parent=1 // pred_fallthru
      _
    // Predicated region
    $region6: #{tpu_custom_call.1} parent=1 // pred_check
      _
    $region7: #{tpu_custom_call.1} parent=1 // pred_check_branch
      %13 = sbr.rel (0) target = $region9
    $region8: #{tpu_custom_call.1} parent=1 // pred_region
      %s15 = ssub.s32 256, 256
      %16 = vsyncadd [#allocation4], %s15
      %s18 = sshll.u32 [#allocation3], 4
      %s19 = int_to_ptr.vmem [resolvable:$true] %s18
      %21 = dma.hbm_to_vmem [thread:$0]  %s1, 256, %s19, [#allocation4]
    $region9: #{tpu_custom_call.1} parent=1 // pred_fallthru
      _
    // Predicated region
    $region10: #{tpu_custom_call.1} parent=1 // pred_check
      _
    $region11: #{tpu_custom_call.1} parent=1 // pred_check_branch
      %23 = sbr.rel (0) target = $region13
    $region12: #{tpu_custom_call.1} parent=1 // pred_region
      %24 = dma.done [#allocation4], 256
    $region13: #{tpu_custom_call.1} parent=1 // pred_fallthru
      _
    %v25 = vld [vmem:[#allocation3] sm:$0xff]
    %v26 = vld [vmem:[#allocation3 + $0x8] sm:$0xff]
    %s27 = sld [smem:[#allocation2]]
    %vm28 = vcmp.ge.f32.partialorder %v25, 0.0
    %vm29 = vcmp.ge.f32.partialorder %v26, 0.0
    %v30 = vstv %s27
    %v31 = vmul.f32 %v30, %v25
    %v32 = vmul.f32 %v30, %v26
    %v33 = vsel %vm28, %v25, %v31
    %v34 = vsel %vm29, %v26, %v32
    %35 = vst [vmem:[#allocation6] sm:$0xff] %v33
    %36 = vst [vmem:[#allocation6 + $0x8] sm:$0xff] %v34
    // Predicated region
    $region14: #{tpu_custom_call.1} parent=1 // pred_check
      _
    $region15: #{tpu_custom_call.1} parent=1 // pred_check_branch
      %38 = sbr.rel (0) target = $region17
    $region16: #{tpu_custom_call.1} parent=1 // pred_region
      %s40 = ssub.s32 256, 256
      %41 = vsyncadd [#allocation5], %s40
      %s43 = sshll.u32 [#allocation6], 4
      %s44 = int_to_ptr.vmem [resolvable:$true] %s43
      %46 = dma.vmem_to_hbm [thread:$0]  %s44, 256, %s2, [#allocation5]
    $region17: #{tpu_custom_call.1} parent=1 // pred_fallthru
      _
    // Predicated region
    $region18: #{tpu_custom_call.1} parent=1 // pred_check
      _
    $region19: #{tpu_custom_call.1} parent=1 // pred_check_branch
      %48 = sbr.rel (0) target = $region21
    $region20: #{tpu_custom_call.1} parent=1 // pred_region
      %49 = dma.done [#allocation5], 256
    $region21: #{tpu_custom_call.1} parent=1 // pred_fallthru
      _
    %50 = vsyncpa [#allocation4], 1
    %51 = vsyncpa [#allocation5], 1

</llo_original>
